<compile_context>
chip_gen: v5e
topology: v5e:2x2
jax: 0.10.0
libtpu: 0.0.40
codegen_flags: <defaults>
</compile_context>

<pallas_src>
import math
from functools import partial

import numpy as np
import jax
import jax.numpy as jnp
from jax import lax
from jax.experimental import pallas as pl
from jax.experimental.pallas import tpu as pltpu


MAX_REL = 3                      # max_relative_position in the reference module
NUM_REL = 2 * MAX_REL + 1        # 7 distinct relative-position embedding rows

_MATMUL_VMEM_LIMIT = 32 * 1024 * 1024
_ATTN_VMEM_LIMIT = 48 * 1024 * 1024    # headroom inside v7x's 64 MiB physical VMEM


def _pick_tile(n, target, floor=128):
    """Largest power-of-two-ish tile <= target that divides n, else n itself.
    TODO(synk): pad to a tile multiple + masked epilogue instead of falling back
    to the full axis for awkward sizes (review item)."""
    t = min(target, n)
    while t > floor and n % t != 0:
        t //= 2
    return t if n % t == 0 else n


# ----------------------------------------------------------------------------
# Tiled matmul kernels:  y = x @ w (+ bias)
#   Inputs are PRE-CAST to the MXU input dtype outside the kernel.
#   f32 VMEM accumulator; K is the innermost ("arbitrary") grid axis.
# ----------------------------------------------------------------------------
def _matmul_kernel(x_ref, w_ref, o_ref, acc_ref):
    @pl.when(pl.program_id(2) == 0)
    def _():
        acc_ref[...] = jnp.zeros_like(acc_ref)

    acc_ref[...] += jnp.dot(x_ref[...], w_ref[...],
                            preferred_element_type=jnp.float32)

    @pl.when(pl.program_id(2) == pl.num_programs(2) - 1)
    def _():
        # reshape handles both (tm, tn) and (1, tm, tn) output blocks.
        o_ref[...] = acc_ref[...].reshape(o_ref.shape).astype(o_ref.dtype)


def _matmul_bias_kernel(x_ref, w_ref, b_ref, o_ref, acc_ref):
    @pl.when(pl.program_id(2) == 0)
    def _():
        acc_ref[...] = jnp.zeros_like(acc_ref)

    acc_ref[...] += jnp.dot(x_ref[...], w_ref[...],
                            preferred_element_type=jnp.float32)

    @pl.when(pl.program_id(2) == pl.num_programs(2) - 1)
    def _():
        o_ref[...] = (acc_ref[...] + b_ref[...]).astype(o_ref.dtype)


def pallas_matmul(x, w_t, bias=None, *, out_dtype=jnp.float32,
                  tm=256, tn=256, tk=512):
    """y = x @ w_t (+ bias).  x: (M, K), w_t: (K, N) — both already in the MXU
    input dtype (bf16 on v6e/v7x).  bias: (N,) f32 or None."""
    M, K = x.shape
    K2, N = w_t.shape
    assert K == K2
    tm, tn, tk = _pick_tile(M, tm), _pick_tile(N, tn), _pick_tile(K, tk)
    grid = (M // tm, N // tn, K // tk)

    in_specs = [
        pl.BlockSpec((tm, tk), lambda i, j, k: (i, k)),
        pl.BlockSpec((tk, tn), lambda i, j, k: (k, j)),
    ]
    if bias is None:
        kernel = _matmul_kernel
        args = (x, w_t)
    else:
        in_specs.append(pl.BlockSpec((1, tn), lambda i, j, k: (0, j)))
        kernel = _matmul_bias_kernel
        args = (x, w_t, bias.reshape(1, N).astype(jnp.float32))

    return pl.pallas_call(
        kernel,
        out_shape=jax.ShapeDtypeStruct((M, N), out_dtype),
        grid=grid,
        in_specs=in_specs,
        out_specs=pl.BlockSpec((tm, tn), lambda i, j, k: (i, j)),
        scratch_shapes=[pltpu.VMEM((tm, tn), jnp.float32)],
        compiler_params=pltpu.CompilerParams(
            dimension_semantics=("parallel", "parallel", "arbitrary"),
            vmem_limit_bytes=_MATMUL_VMEM_LIMIT),
    )(*args)


def pallas_qkv_matmul(x, w_qkv_t, *, out_dtype, tm=256, tn=256, tk=512):
    """Fused QKV projection.  x: (M, K), w_qkv_t: (K, 3*dim) = [Wq^T|Wk^T|Wv^T].
    The kernel's output BlockSpec writes directly into a (3, M, dim) array, so
    no plain-JAX lane slicing of an (M, 3*dim) tensor is needed afterwards."""
    M, K = x.shape
    K2, N3 = w_qkv_t.shape
    assert K == K2 and N3 % 3 == 0
    dim = N3 // 3
    tm, tn, tk = _pick_tile(M, tm), _pick_tile(dim, tn), _pick_tile(K, tk)
    nb = dim // tn                       # output-lane blocks per q/k/v part
    grid = (M // tm, N3 // tn, K // tk)

    return pl.pallas_call(
        _matmul_kernel,
        out_shape=jax.ShapeDtypeStruct((3, M, dim), out_dtype),
        grid=grid,
        in_specs=[pl.BlockSpec((tm, tk), lambda i, j, k: (i, k)),
                  pl.BlockSpec((tk, tn), lambda i, j, k: (k, j))],
        out_specs=pl.BlockSpec((1, tm, tn),
                               lambda i, j, k: (j // nb, i, j % nb)),
        scratch_shapes=[pltpu.VMEM((tm, tn), jnp.float32)],
        compiler_params=pltpu.CompilerParams(
            dimension_semantics=("parallel", "parallel", "arbitrary"),
            vmem_limit_bytes=_MATMUL_VMEM_LIMIT),
    )(x, w_qkv_t)


# ----------------------------------------------------------------------------
# Attention core kernel — grid (batch, q-tile); all heads inside, with direct
# per-head lane-slice stores (no concat).
#   q block : (1, 1, tq, dim)     k,v blocks : (1, 1, Lk, dim)
#   rel_k, rel_v : (7, hd)        raw embedding tables (tiny, grid-invariant)
# Outputs: context (1, tq, dim) and (optionally) probs (1, H, tq, Lk).
# ----------------------------------------------------------------------------
def _attention_kernel(q_ref, k_ref, v_ref, rk_ref, rv_ref, out_ref,
                      *maybe_attn_ref,
                      num_heads, head_dim, inv_scale, mxu_dtype, approx_recip):
    attn_ref = maybe_attn_ref[0] if maybe_attn_ref else None
    tq = q_ref.shape[2]
    Lk = k_ref.shape[2]
    q0 = pl.program_id(1) * tq           # global q offset of this tile

    # Banded relative-position index matrix, built in-registers (no HBM traffic):
    # rel_idx[q, k] = clip(k - q, -MAX_REL, MAX_REL) + MAX_REL  in [0, NUM_REL).
    qi = lax.broadcasted_iota(jnp.int32, (tq, Lk), 0) + q0
    ki = lax.broadcasted_iota(jnp.int32, (tq, Lk), 1)
    rel_idx = jnp.clip(ki - qi, -MAX_REL, MAX_REL) + MAX_REL
    band_masks = [rel_idx == r for r in range(NUM_REL)]       # shared by all heads

    rel_k = rk_ref[...].astype(mxu_dtype)                     # (7, hd)
    rel_v = rv_ref[...].astype(mxu_dtype)                     # (7, hd)
    contract_last = (((1,), (1,)), ((), ()))                  # 'qd,kd->qk'

    for h in range(num_heads):
        lo = h * head_dim
        q_h = q_ref[0, 0, :, lo:lo + head_dim].astype(mxu_dtype)   # (tq, hd)
        k_h = k_ref[0, 0, :, lo:lo + head_dim].astype(mxu_dtype)   # (Lk, hd)
        v_h = v_ref[0, 0, :, lo:lo + head_dim].astype(mxu_dtype)   # (Lk, hd)

        # content-content logits (MXU, contraction on last dims, no transpose).
        s = lax.dot_general(q_h, k_h, contract_last,
                            preferred_element_type=jnp.float32)    # (tq, Lk)
        # content-position logits: project q onto the 7 relative rows, then
        # scatter onto the Toeplitz bands; band 6 (k - q >= +3) is the default,
        # so only 6 selects are needed.
        p = lax.dot_general(q_h, rel_k, contract_last,
                            preferred_element_type=jnp.float32)    # (tq, 7)
        bias = p[:, NUM_REL - 1:NUM_REL]                           # broadcasts
        for r in range(NUM_REL - 1):
            bias = jnp.where(band_masks[r], p[:, r:r + 1], bias)

        # NOTE: the reference DIVIDES by scale (= hd**-0.5), i.e. multiplies the
        # logits by sqrt(head_dim); inv_scale = 1/scale reproduces it exactly.
        logits = (s + bias) * inv_scale

        # f32 softmax over keys.
        m = jnp.max(logits, axis=-1, keepdims=True)
        e = jnp.exp(logits - m)
        denom = jnp.sum(e, axis=-1, keepdims=True)
        if approx_recip:
            attn_h = e * pl.reciprocal(denom, approx=True)          # EUP slot
        else:
            attn_h = e / denom                                      # exact path
        # attn_drop(p=0.0) is the identity (eval semantics).

        # content-content value term (MXU).
        w1 = jnp.dot(attn_h.astype(mxu_dtype), v_h,
                     preferred_element_type=jnp.float32)            # (tq, hd)
        # content-position value term: reduce attn over each relative band
        # -> (tq, 7), then a tiny (tq,7)@(7,hd) MXU matmul.
        band = jnp.concatenate(
            [jnp.sum(jnp.where(band_masks[r], attn_h, 0.0), axis=-1, keepdims=True)
             for r in range(NUM_REL)], axis=-1)                     # (tq, 7)
        w2 = jnp.dot(band.astype(mxu_dtype), rel_v,
                     preferred_element_type=jnp.float32)            # (tq, hd)

        # Direct per-head store into the lane slice of the (tq, dim) out block.
        out_ref[0, :, lo:lo + head_dim] = (w1 + w2).astype(out_ref.dtype)
        if attn_ref is not None:
            attn_ref[0, h] = attn_h.astype(attn_ref.dtype)


def pallas_attention_core(q4, k4, v4, qkv_index, rel_k_table, rel_v_table, *,
                          num_heads, inv_scale, mxu_dtype, ctx_dtype,
                          attn_dtype, return_attn, tq_target=128):
    """q4/k4/v4: (S, B, L, dim) arrays (S=3 for the fused QKV array passed three
    times, S=1 otherwise); qkv_index selects which leading slot each role uses."""
    _, B, Lq, dim = q4.shape
    Lk = k4.shape[2]
    hd = dim // num_heads
    tq = _pick_tile(Lq, tq_target, floor=8)
    grid = (B, Lq // tq)
    iq, ik, iv = qkv_index

    kernel = partial(_attention_kernel, num_heads=num_heads, head_dim=hd,
                     inv_scale=inv_scale, mxu_dtype=mxu_dtype,
                     approx_recip=(np.dtype(mxu_dtype) != np.dtype(jnp.float32)))

    in_specs = [
        pl.BlockSpec((1, 1, tq, dim), lambda b, t, _i=iq: (_i, b, t, 0)),
        pl.BlockSpec((1, 1, Lk, dim), lambda b, t, _i=ik: (_i, b, 0, 0)),
        pl.BlockSpec((1, 1, Lk, dim), lambda b, t, _i=iv: (_i, b, 0, 0)),
        pl.BlockSpec((NUM_REL, hd), lambda b, t: (0, 0)),
        pl.BlockSpec((NUM_REL, hd), lambda b, t: (0, 0)),
    ]
    out_struct = jax.ShapeDtypeStruct((B, Lq, dim), ctx_dtype)
    out_spec = pl.BlockSpec((1, tq, dim), lambda b, t: (b, t, 0))
    if return_attn:
        out_shape = (out_struct,
                     jax.ShapeDtypeStruct((B, num_heads, Lq, Lk), attn_dtype))
        out_specs = (out_spec,
                     pl.BlockSpec((1, num_heads, tq, Lk), lambda b, t: (b, 0, t, 0)))
    else:
        out_shape = out_struct
        out_specs = out_spec

    result = pl.pallas_call(
        kernel,
        out_shape=out_shape,
        grid=grid,
        in_specs=in_specs,
        out_specs=out_specs,
        compiler_params=pltpu.CompilerParams(
            dimension_semantics=("parallel", "parallel"),
            vmem_limit_bytes=_ATTN_VMEM_LIMIT),
    )(q4, k4, v4, rel_k_table, rel_v_table)

    if return_attn:
        return result
    return result, None


# ----------------------------------------------------------------------------
# One-time weight preparation (hoisted out of the per-call path).
# ----------------------------------------------------------------------------
def prepare_params(params, mxu_dtype=jnp.bfloat16):
    wq_t = params["wq"].T.astype(mxu_dtype)
    wk_t = params["wk"].T.astype(mxu_dtype)
    wv_t = params["wv"].T.astype(mxu_dtype)
    return {
        "mxu_dtype": mxu_dtype,
        "wq_t": wq_t, "wk_t": wk_t, "wv_t": wv_t,
        "w_qkv_t": jnp.concatenate([wq_t, wk_t, wv_t], axis=1),   # (dim, 3*dim)
        "wp_t": params["wp"].T.astype(mxu_dtype),
        "bp": params["bp"].astype(jnp.float32),
        "rel_k_table": params["rel_k_table"].astype(mxu_dtype),
        "rel_v_table": params["rel_v_table"].astype(mxu_dtype),
    }


# ----------------------------------------------------------------------------
# Full Attention.forward
# ----------------------------------------------------------------------------
def attention_forward(prep, query, key, value, mask=None, *, num_heads,
                      return_attn=True, attn_dtype=None, fuse_qkv=None):
    if mask is not None:
        # TODO(synk): optional attention-mask path (masked_fill) not implemented.
        raise NotImplementedError("mask != None is not supported by this kernel")

    mxu_dtype = prep["mxu_dtype"]
    B, Lq, dim = query.shape
    Lk, Lv = key.shape[1], value.shape[1]
    assert Lk == Lv, "reference requires len_k == len_v (attn @ value)"
    hd = dim // num_heads
    inv_scale = 1.0 / (hd ** (-0.5))     # the reference DIVIDES logits by scale
    if attn_dtype is None:
        attn_dtype = (jnp.float32 if np.dtype(mxu_dtype) == np.dtype(jnp.float32)
                      else jnp.bfloat16)
    if fuse_qkv is None:                 # auto-detect self-attention (eager mode)
        fuse_qkv = (query is key) and (key is value)

    if fuse_qkv:
        # Single fused matmul; output lands as (3, B*L, dim) straight from the
        # kernel, so no plain-JAX lane slices of a (M, 3*dim) tensor.
        xq = query.reshape(B * Lq, dim).astype(mxu_dtype)       # one pre-cast pass
        qkv = pallas_qkv_matmul(xq, prep["w_qkv_t"], out_dtype=mxu_dtype)
        qkv4 = qkv.reshape(3, B, Lq, dim)                       # free view
        q4 = k4 = v4 = qkv4
        qkv_index = (0, 1, 2)
    else:
        q4 = pallas_matmul(query.reshape(B * Lq, dim).astype(mxu_dtype),
                           prep["wq_t"], out_dtype=mxu_dtype).reshape(1, B, Lq, dim)
        k4 = pallas_matmul(key.reshape(B * Lk, dim).astype(mxu_dtype),
                           prep["wk_t"], out_dtype=mxu_dtype).reshape(1, B, Lk, dim)
        v4 = pallas_matmul(value.reshape(B * Lv, dim).astype(mxu_dtype),
                           prep["wv_t"], out_dtype=mxu_dtype).reshape(1, B, Lv, dim)
        qkv_index = (0, 0, 0)

    # Heads split inside the kernel; no (0,2,1,3) transposes anywhere.
    ctx, attn = pallas_attention_core(
        q4, k4, v4, qkv_index, prep["rel_k_table"], prep["rel_v_table"],
        num_heads=num_heads, inv_scale=inv_scale, mxu_dtype=mxu_dtype,
        ctx_dtype=mxu_dtype, attn_dtype=attn_dtype, return_attn=return_attn)

    x = pallas_matmul(ctx.reshape(B * Lq, dim), prep["wp_t"], prep["bp"],
                      out_dtype=jnp.float32).reshape(B, Lq, dim)
    # proj_drop(p=0.0) is the identity (eval semantics).
    return x, attn


# ----------------------------------------------------------------------------
# Pure-JAX reference (mirrors the PyTorch module) for validation.
# ----------------------------------------------------------------------------
def relative_embeddings(table, length_q, length_k, max_rel):
    rq = jnp.arange(length_q)
    rk = jnp.arange(length_k)
    dist = rk[None, :] - rq[:, None]
    idx = jnp.clip(dist, -max_rel, max_rel) + max_rel
    return table[idx]                                              # (Lq, Lk, hd)


def attention_reference(params, query, key, value, *, num_heads):
    B, Lq, dim = query.shape
    Lk = key.shape[1]
    Lv = value.shape[1]
    hd = dim // num_heads
    scale = hd ** (-0.5)

    q = query @ params["wq"].T
    k = key @ params["wk"].T
    v = value @ params["wv"].T
    rq1 = q.reshape(B, Lq, num_heads, hd).transpose(0, 2, 1, 3)
    rk1 = k.reshape(B, Lk, num_heads, hd).transpose(0, 2, 1, 3)
    rv1 = v.reshape(B, Lv, num_heads, hd).transpose(0, 2, 1, 3)

    attn1 = jnp.einsum("bhqd,bhkd->bhqk", rq1, rk1)
    rel_k = relative_embeddings(params["rel_k_table"], Lq, Lk, MAX_REL)
    rel_v = relative_embeddings(params["rel_v_table"], Lq, Lv, MAX_REL)
    attn2 = jnp.einsum("bhqd,qkd->bhqk", rq1, rel_k)
    attn = jax.nn.softmax((attn1 + attn2) / scale, axis=-1)

    w1 = jnp.einsum("bhqk,bhkd->bhqd", attn, rv1)
    w2 = jnp.einsum("bhqk,qkd->bhqd", attn, rel_v)
    x = (w1 + w2).transpose(0, 2, 1, 3).reshape(B, Lq, dim)
    x = x @ params["wp"].T + params["bp"]
    return x, attn


# ----------------------------------------------------------------------------
# Deterministic parameter init (shapes from Attention.__init__)
# ----------------------------------------------------------------------------
def init_params(rng, dim, num_heads):
    hd = dim // num_heads
    keys = jax.random.split(rng, 7)

    def xavier(k, shape):
        bound = math.sqrt(6.0 / (shape[0] + shape[1]))
        return jax.random.uniform(k, shape, jnp.float32, -bound, bound)

    return {
        "wq": xavier(keys[0], (dim, dim)),
        "wk": xavier(keys[1], (dim, dim)),
        "wv": xavier(keys[2], (dim, dim)),
        "wp": xavier(keys[3], (dim, dim)),
        "bp": jax.random.uniform(keys[4], (dim,), jnp.float32, -0.1, 0.1),
        "rel_k_table": xavier(keys[5], (NUM_REL, hd)),
        "rel_v_table": xavier(keys[6], (NUM_REL, hd)),
    }


if __name__ == "__main__":
    B, L, dim, num_heads = 2, 8, 32, 4       # head_dim = 8

    root = jax.random.PRNGKey(0)
    kp, kq, kk, kv = jax.random.split(root, 4)

    params = init_params(kp, dim, num_heads)
    query = jax.random.normal(kq, (B, L, dim), jnp.float32)
    key = jax.random.normal(kk, (B, L, dim), jnp.float32)
    value = jax.random.normal(kv, (B, L, dim), jnp.float32)

    # 1) Perf path: bf16 inputs/weights/intermediates, f32 accumulation + softmax.
    prep_bf16 = prepare_params(params, jnp.bfloat16)
    x, attn = attention_forward(prep_bf16, query, key, value, num_heads=num_heads)
    jax.block_until_ready((x, attn))
    assert x.shape == (B, L, dim) and x.dtype == jnp.float32
    assert attn.shape == (B, num_heads, L, L)
    assert bool(jnp.all(jnp.isfinite(x)))
    assert bool(jnp.all(jnp.isfinite(attn.astype(jnp.float32))))

    # 2) f32 path: validate numerics against the pure-JAX reference.
    prep_f32 = prepare_params(params, jnp.float32)
    x32, attn32 = attention_forward(prep_f32, query, key, value,
                                    num_heads=num_heads)
    x_want, attn_want = attention_reference(params, query, key, value,
                                            num_heads=num_heads)
    assert jnp.allclose(attn32, attn_want, rtol=2e-2, atol=2e-2), "attn mismatch"
    assert jnp.allclose(x32, x_want, rtol=2e-2, atol=2e-2), "output mismatch"

    # 3) Self-attention exercises the fused single-matmul QKV projection path
    #    (3-way output written directly by the kernel's out BlockSpec).
    x_sa, attn_sa = attention_forward(prep_bf16, query, query, query,
                                      num_heads=num_heads)
    jax.block_until_ready((x_sa, attn_sa))
    assert x_sa.shape == (B, L, dim)

    print("KERNEL_OK")
</pallas_src>

<mosaic_0001>
module attributes {stable_mosaic.version = 11 : i64} {
  func.func @_matmul_kernel(%arg0: i32, %arg1: i32, %arg2: i32, %arg3: memref<16x32xbf16, #tpu.memory_space<vmem>>, %arg4: memref<32x32xbf16, #tpu.memory_space<vmem>>, %arg5: memref<16x32xbf16, #tpu.memory_space<vmem>>, %arg6: memref<16x32xf32, #tpu.memory_space<vmem>>) attributes {dimension_semantics = [#tpu.dimension_semantics<parallel>, #tpu.dimension_semantics<parallel>, #tpu.dimension_semantics<arbitrary>], iteration_bounds = array<i64: 1, 1, 1>, scalar_prefetch = 0 : i64, scratch_operands = 1 : i64, tpu.core_type = #tpu.core_type<tc>, window_params = [{transform_indices = @transform_0, window_bounds = array<i64: 16, 32>}, {transform_indices = @transform_1, window_bounds = array<i64: 32, 32>}, {transform_indices = @transform_2, window_bounds = array<i64: 16, 32>}]} {
    %c0_i32 = arith.constant 0 : i32
    %0 = arith.cmpi eq, %arg2, %c0_i32 : i32
    %1 = arith.extui %0 : i1 to i32
    %c0_i32_0 = arith.constant 0 : i32
    %2 = arith.cmpi ne, %1, %c0_i32_0 : i32
    scf.if %2 {
      %cst_10 = arith.constant 0.000000e+00 : f32
      %12 = vector.broadcast %cst_10 : f32 to vector<16x32xf32>
      %c0_11 = arith.constant 0 : index
      %c0_12 = arith.constant 0 : index
      %13 = vector.load %arg6[%c0_11, %c0_12] : memref<16x32xf32, #tpu.memory_space<vmem>>, vector<16x32xf32>
      tpu.vector_store %arg6[%c0_11, %c0_12], %12 {strides = array<i32>} : memref<16x32xf32, #tpu.memory_space<vmem>>, vector<16x32xf32>,
    } else {
    }
    %c0 = arith.constant 0 : index
    %c0_1 = arith.constant 0 : index
    %3 = vector.load %arg6[%c0, %c0_1] : memref<16x32xf32, #tpu.memory_space<vmem>>, vector<16x32xf32>
    %c0_2 = arith.constant 0 : index
    %c0_3 = arith.constant 0 : index
    %4 = vector.load %arg3[%c0_2, %c0_3] : memref<16x32xbf16, #tpu.memory_space<vmem>>, vector<16x32xbf16>
    %c0_4 = arith.constant 0 : index
    %c0_5 = arith.constant 0 : index
    %5 = vector.load %arg4[%c0_4, %c0_5] : memref<32x32xbf16, #tpu.memory_space<vmem>>, vector<32x32xbf16>
    %cst = arith.constant dense<0.000000e+00> : vector<16x32xf32>
    %6 = tpu.matmul %4, %5, %cst {dimension_numbers = #tpu.dot_dimension_numbers<[1], [0], [0], [1], [0, 0, 1, 1], [], []>} : vector<16x32xbf16>, vector<32x32xbf16>, vector<16x32xf32> -> vector<16x32xf32>
    %7 = arith.addf %3, %6 : vector<16x32xf32>
    %c0_6 = arith.constant 0 : index
    %c0_7 = arith.constant 0 : index
    %8 = vector.load %arg6[%c0_6, %c0_7] : memref<16x32xf32, #tpu.memory_space<vmem>>, vector<16x32xf32>
    tpu.vector_store %arg6[%c0_6, %c0_7], %7 {strides = array<i32>} : memref<16x32xf32, #tpu.memory_space<vmem>>, vector<16x32xf32>,
    %c0_i32_8 = arith.constant 0 : i32
    %9 = arith.cmpi eq, %arg2, %c0_i32_8 : i32
    %10 = arith.extui %9 : i1 to i32
    %c0_i32_9 = arith.constant 0 : i32
    %11 = arith.cmpi ne, %10, %c0_i32_9 : i32
    scf.if %11 {
      %c0_10 = arith.constant 0 : index
      %c0_11 = arith.constant 0 : index
      %12 = vector.load %arg6[%c0_10, %c0_11] : memref<16x32xf32, #tpu.memory_space<vmem>>, vector<16x32xf32>
      %13 = arith.truncf %12 : vector<16x32xf32> to vector<16x32xbf16>
      %c0_12 = arith.constant 0 : index
      %c0_13 = arith.constant 0 : index
      %14 = vector.load %arg5[%c0_12, %c0_13] : memref<16x32xbf16, #tpu.memory_space<vmem>>, vector<16x32xbf16>
      tpu.vector_store %arg5[%c0_12, %c0_13], %13 {strides = array<i32>} : memref<16x32xbf16, #tpu.memory_space<vmem>>, vector<16x32xbf16>,
    } else {
    }
    return
  }
  func.func @transform_0(%arg0: i32, %arg1: i32, %arg2: i32) -> (i32, i32) {
    %c0_i32 = arith.constant 0 : i32
    return %arg0, %arg2 : i32, i32
  }
  func.func @transform_1(%arg0: i32, %arg1: i32, %arg2: i32) -> (i32, i32) {
    %c0_i32 = arith.constant 0 : i32
    return %arg2, %arg1 : i32, i32
  }
  func.func @transform_2(%arg0: i32, %arg1: i32, %arg2: i32) -> (i32, i32) {
    %c0_i32 = arith.constant 0 : i32
    return %arg0, %arg1 : i32, i32
  }
}

</mosaic_0001>

<llo_original>
// kernel: tpu_custom_call.1
$region0: #{tpu_custom_call.1}
  #allocation0 [shape = 'u32[]', space=smem, size = 0x4, offset = 0x4, fixed_abs, tag = 'smem constant byte address 0x4 - core index']
  #allocation1 [shape = 'u32[72,128]{1,0:T(1,128)}', space=vmem, size = 0x9000, scoped, tag = 'internal scratch']
  #allocation2 [shape = 'f32[16,32]{1,0:T(8,128)}', space=vmem, size = 0x2000, scoped, tag = 'scratch operand']
  %s0 = inlined_call_operand.hbm [shape: bf16[16,32], index: 0, kind: input, shape index: {}]
  %s1 = inlined_call_operand.hbm [shape: bf16[32,32], index: 1, kind: input, shape index: {}]
  %s2 = inlined_call_operand.hbm [shape: bf16[16,32], index: 2, kind: output, shape index: {}]
  %s3 = sld [smem:[#allocation0]]
  $region34: #{tpu_custom_call.1} parent=0
    _
  %s5 = ssub.s32 1, %s3
  %s6 = scalar_select 0, %s5, %s3
  $region1: #{tpu_custom_call.1} parent=0
    #allocation3 [shape = 'u8[4096]{0}', space=vmem, size = 0x1000, scoped, tag = 'input window, operand 0, single buffered']
    #allocation4 [shape = 's32[1]{0}', space=sflag, size = 0x4, scoped, tag = 'scoped memory for tpu_custom_call.1']
    #allocation5 [shape = 's32[1]{0}', space=sflag, size = 0x4, scoped, tag = 'scoped memory for tpu_custom_call.1']
    #allocation6 [shape = 'u8[8192]{0}', space=vmem, size = 0x2000, scoped, tag = 'input window, operand 1, single buffered']
    #allocation7 [shape = 's32[1]{0}', space=sflag, size = 0x4, scoped, tag = 'scoped memory for tpu_custom_call.1']
    #allocation8 [shape = 'u8[4096]{0}', space=vmem, size = 0x1000, scoped, tag = 'output window, operand 0, single buffered']
    %7 = vsyncpa [#allocation4], 0
    %8 = vsyncpa [#allocation7], 0
    %9 = vsyncpa [#allocation5], 0
    // Predicated region
    $region2: #{tpu_custom_call.1} parent=1 // pred_check
      _
    $region3: #{tpu_custom_call.1} parent=1 // pred_check_branch
      %11 = sbr.rel (0) target = $region5
    $region4: #{tpu_custom_call.1} parent=1 // pred_region
      %13 = vsyncadd [#allocation4], 0
      %s14 = sshll.u32 %s0, 4
      %s15 = int_to_ptr.hbm [resolvable:$true] %s14
      %s16 = sshll.u32 [#allocation3], 4
      %s17 = int_to_ptr.vmem [resolvable:$true] %s16
      %22 = dma.hbm_to_vmem [thread:$0]  %s15, 128, %s17, [#allocation4], 64, 64, 4
    $region5: #{tpu_custom_call.1} parent=1 // pred_fallthru
      _
    // Predicated region
    $region6: #{tpu_custom_call.1} parent=1 // pred_check
      _
    $region7: #{tpu_custom_call.1} parent=1 // pred_check_branch
      %24 = sbr.rel (0) target = $region9
    $region8: #{tpu_custom_call.1} parent=1 // pred_region
      %26 = vsyncadd [#allocation7], 0
      %s27 = sshll.u32 %s1, 4
      %s28 = int_to_ptr.hbm [resolvable:$true] %s27
      %s29 = sshll.u32 [#allocation6], 4
      %s30 = int_to_ptr.vmem [resolvable:$true] %s29
      %35 = dma.hbm_to_vmem [thread:$0]  %s28, 256, %s30, [#allocation7], 64, 64, 4
    $region9: #{tpu_custom_call.1} parent=1 // pred_fallthru
      _
    // Predicated region
    $region10: #{tpu_custom_call.1} parent=1 // pred_check
      _
    $region11: #{tpu_custom_call.1} parent=1 // pred_check_branch
      %37 = sbr.rel (0) target = $region13
    $region12: #{tpu_custom_call.1} parent=1 // pred_region
      %39 = dma.done [#allocation4], 128
    $region13: #{tpu_custom_call.1} parent=1 // pred_fallthru
      _
    // Predicated region
    $region14: #{tpu_custom_call.1} parent=1 // pred_check
      _
    $region15: #{tpu_custom_call.1} parent=1 // pred_check_branch
      %41 = sbr.rel (0) target = $region17
    $region16: #{tpu_custom_call.1} parent=1 // pred_region
      %43 = dma.done [#allocation7], 256
    $region17: #{tpu_custom_call.1} parent=1 // pred_fallthru
      _
    %p45 = scmp.eq.s32.totalorder 0, 0
    // Predicated region
    $region18: #{tpu_custom_call.1} parent=1 // pred_check
      %p46 = pneg %p45
    $region19: #{tpu_custom_call.1} parent=1 // pred_check_branch
      %48 = sbr.rel (%p46) target = $region21
    $region20: #{tpu_custom_call.1} parent=1 // pred_region
      %vm49 = vcmask 261120
      %50 = vst.msk [vmem:[#allocation2] sm:$0xff] %vm49, 0.0
      %51 = vst.msk [vmem:[#allocation2 + $0x8] sm:$0xff] %vm49, 0.0
    $region21: #{tpu_custom_call.1} parent=1 // pred_fallthru
      _
    %v52 = vld [vmem:[#allocation2] sm:$0xff]
    %v53 = vld [vmem:[#allocation2 + $0x8] sm:$0xff]
    %v54 = vld [vmem:[#allocation3] sm:$0xf]
    %v55 = vld [vmem:[#allocation3 + $0x4] sm:$0xf]
    %v56 = vld [vmem:[#allocation6] sm:$0xf]
    %v57 = vld [vmem:[#allocation6 + $0x4] sm:$0xf]
    %v58 = vld [vmem:[#allocation6 + $0x8] sm:$0xf]
    %v59 = vld [vmem:[#allocation6 + $0xc] sm:$0xf]
    %v62 = vunpack.c.l.b16 %v54
    %v63 = vunpack.c.l.b16 %v55
    %v64 = vpack.c.b16 %v63, %v62
    %v69 = vunpack.c.l.b16 %v56
    %v70 = vunpack.c.l.b16 %v57
    %v71 = vunpack.c.l.b16 %v58
    %v72 = vunpack.c.l.b16 %v59
    %v73 = vpack.c.b16 %v70, %v69
    %v74 = vpack.c.b16 %v72, %v71
    %vm77 = vcmask 261120
    %v79 = vsel %vm77, %v64, 0
    %81 = vmatpush.bf16.msra.mxu0 0
    %82 = vmatpush.bf16.msra.mxu0 0
    %83 = vmatpush.bf16.msra.mxu0 0
    %84 = vmatpush.bf16.msra.mxu0 0
    %85 = vmatpush.bf16.msra.mxu0 0
    %86 = vmatpush.bf16.msra.mxu0 0
    %87 = vmatpush.bf16.msra.mxu0 %v74
    %88 = vmatpush.bf16.msra.mxu0 %v73
    %89 = vmatmul.bf16.gmra.mxu0 %v79
    %v90 = vpop.f32.mrf.mxu0
    %v91 = vadd.f32 0.0, %v90
    %v92 = vpop.f32.mrf.mxu0
    %v93 = vadd.f32 0.0, %v92
    %94 = vdwg.mxu0
    %v95 = vadd.f32 %v52, %v91
    %v96 = vadd.f32 %v53, %v93
    %97 = vst.msk [vmem:[#allocation2] sm:$0xff] %vm77, %v95
    %98 = vst.msk [vmem:[#allocation2 + $0x8] sm:$0xff] %vm77, %v96
    // Predicated region
    $region22: #{tpu_custom_call.1} parent=1 // pred_check
      %p99 = pneg %p45
    $region23: #{tpu_custom_call.1} parent=1 // pred_check_branch
      %101 = sbr.rel (%p99) target = $region25
    $region24: #{tpu_custom_call.1} parent=1 // pred_region
      %v102 = vld [vmem:[#allocation2] sm:$0xff]
      %v103 = vld [vmem:[#allocation2 + $0x8] sm:$0xff]
      %v104 = vpack.c.bf16 %v102, %v102
      %v105 = vpack.c.bf16 %v103, %v103
      %vm106 = vcmask 257024
      %107 = vst.msk [vmem:[#allocation8] sm:$0xf] %vm106, %v104
      %108 = vst.msk [vmem:[#allocation8 + $0x4] sm:$0xf] %vm106, %v105
    $region25: #{tpu_custom_call.1} parent=1 // pred_fallthru
      _
    // Predicated region
    $region26: #{tpu_custom_call.1} parent=1 // pred_check
      _
    $region27: #{tpu_custom_call.1} parent=1 // pred_check_branch
      %110 = sbr.rel (0) target = $region29
    $region28: #{tpu_custom_call.1} parent=1 // pred_region
      %112 = vsyncadd [#allocation5], 0
      %s113 = sshll.u32 [#allocation8], 4
      %s114 = int_to_ptr.vmem [resolvable:$true] %s113
      %s115 = sshll.u32 %s2, 4
      %s116 = int_to_ptr.hbm [resolvable:$true] %s115
      %121 = dma.vmem_to_hbm [thread:$0]  %s114, 128, %s116, [#allocation5], 64, 64, 4
    $region29: #{tpu_custom_call.1} parent=1 // pred_fallthru
      _
    // Predicated region
    $region30: #{tpu_custom_call.1} parent=1 // pred_check
      _
    $region31: #{tpu_custom_call.1} parent=1 // pred_check_branch
      %123 = sbr.rel (0) target = $region33
    $region32: #{tpu_custom_call.1} parent=1 // pred_region
      %125 = dma.done [#allocation5], 128
    $region33: #{tpu_custom_call.1} parent=1 // pred_fallthru
      _
    %126 = vsyncpa [#allocation4], 1
    %127 = vsyncpa [#allocation7], 1
    %128 = vsyncpa [#allocation5], 1

</llo_original>
